<compile_context>
chip_gen: v6e
topology: v6e:2x2x1
jax: 0.10.0
libtpu: 0.0.40
codegen_flags: <defaults>
</compile_context>

<pallas_src>
import functools

import jax
import jax.numpy as jnp
from jax.experimental import pallas as pl
from jax.experimental.pallas import tpu as pltpu


def patch_embed_kernel(p_ref, w_ref, tab_ref, o_ref):
    # p_ref:   (IB, N+1, Kp)  bf16  patches of IB images; row 0 of each image is
    #                               zeros (cls slot), K ordered (c, i, j)
    # w_ref:   (Kp, Ep)       bf16  flattened conv weight   (VMEM-resident)
    # tab_ref: (N+1, Ep)      f32   row0 = cls+pos[0], rows 1..N = pos[1:]+bias
    # o_ref:   (IB, N+1, Ep)        output tokens for these images
    acc = jnp.einsum(
        "bnk,ke->bne", p_ref[...], w_ref[...],
        preferred_element_type=jnp.float32,
    )                                                     # (IB, N+1, Ep) on MXU
    # single aligned, unmasked full-block store (cls row comes from the zero
    # patch row + table row 0)
    o_ref[...] = (acc + tab_ref[...][None, :, :]).astype(o_ref.dtype)


@functools.partial(jax.jit, static_argnums=(5, 6))
def patch_embedding_forward(x, conv_w, conv_b, cls_token, pos, patch_size,
                            out_dtype=jnp.bfloat16):
    """x: [B, C, H, W] (NCHW).  Returns [B, N+1, E] with the cls token first."""
    B, C, H, W = x.shape
    P = patch_size
    assert H % P == 0 and W % P == 0
    Hp, Wp = H // P, W // P
    N = Hp * Wp
    E = conv_w.shape[0]
    K = C * P * P

    # --- glue: unfold NCHW image into patches [B, N, K], K ordered (c, i, j)
    #     to match the Conv2d weight flatten order.  Cast to bf16 *before* the
    #     unfold so the materialized tensor is half-width.
    xb = x.astype(jnp.bfloat16)
    patches = xb.reshape(B, C, Hp, P, Wp, P).transpose(0, 2, 4, 1, 3, 5)
    patches = patches.reshape(B, N, K)

    # lane-pad K and E to multiples of 128 (dense MXU contraction / unmasked
    # stores); no-op for standard ViT widths (K=E=768).
    Kp = ((K + 127) // 128) * 128
    Ep = ((E + 127) // 128) * 128

    # prepend a zero row per image (cls slot) and zero-pad K -> kernel does one
    # aligned full-block store with no sublane-offset epilogue.
    patches = jnp.pad(patches, ((0, 0), (1, 0), (0, Kp - K)))      # (B, N+1, Kp)

    # conv weight (E, C, P, P) -> (K, E), bf16 for the MXU; zero-pad K rows / E cols.
    w_mat = conv_w.reshape(E, K).T.astype(jnp.bfloat16)            # (K, E)
    w_mat = jnp.pad(w_mat, ((0, Kp - K), (0, Ep - E)))             # (Kp, Ep)

    # single additive table (f32): row 0 = cls + pos[0]; rows 1..N = pos[1:] + bias.
    table = jnp.concatenate(
        [(cls_token[0, 0] + pos[0])[None, :], pos[1:] + conv_b[None, :]], axis=0
    ).astype(jnp.float32)                                          # (N+1, E)
    table = jnp.pad(table, ((0, 0), (0, Ep - E)))                  # (N+1, Ep)

    # images per grid step: largest divisor of B that is <= 8 (amortizes the
    # fixed per-grid-step overhead, esp. on v7x).
    IB = 1
    for cand in range(min(B, 8), 0, -1):
        if B % cand == 0:
            IB = cand
            break

    # VMEM budget: double-buffered per-step in/out blocks; resident operands
    # budgeted 2x (constant-index inputs may still be double-buffered).
    out_bytes = jnp.dtype(out_dtype).itemsize
    blk_in = IB * (N + 1) * Kp * 2                                 # bf16 patches block
    blk_out = IB * (N + 1) * Ep * out_bytes                        # output block
    resident = 2 * (Kp * Ep * 2 + (N + 1) * Ep * 4)                # weight + table
    need = 2 * (blk_in + blk_out) + resident
    vmem_limit = int(min(max(2 * need, 16 * 1024 * 1024), 48 * 1024 * 1024))

    cost = pl.CostEstimate(
        flops=2 * B * (N + 1) * Kp * Ep,
        bytes_accessed=(B * (N + 1) * Kp * 2) + (Kp * Ep * 2)
        + ((N + 1) * Ep * 4) + (B * (N + 1) * Ep * out_bytes),
        transcendentals=0,
    )

    out = pl.pallas_call(
        patch_embed_kernel,
        out_shape=jax.ShapeDtypeStruct((B, N + 1, Ep), out_dtype),
        grid_spec=pltpu.PrefetchScalarGridSpec(
            num_scalar_prefetch=0,
            grid=(B // IB,),
            in_specs=[
                pl.BlockSpec((IB, N + 1, Kp), lambda b: (b, 0, 0)),
                pl.BlockSpec((Kp, Ep), lambda b: (0, 0)),          # resident weight
                pl.BlockSpec((N + 1, Ep), lambda b: (0, 0)),       # resident add table
            ],
            out_specs=pl.BlockSpec((IB, N + 1, Ep), lambda b: (b, 0, 0)),
        ),
        compiler_params=pltpu.CompilerParams(
            dimension_semantics=("parallel",),
            vmem_limit_bytes=vmem_limit,
        ),
        cost_estimate=cost,
    )(patches, w_mat, table)

    if Ep != E:
        # TODO(synk): for non-128-multiple E, prefer keeping the padded width
        # through to the consumer; this slice is an extra HBM pass.
        out = out[..., :E]
    return out


def reference_forward(x, conv_w, conv_b, cls_token, pos, patch_size):
    """Pure-JAX (f32) reference matching the PyTorch module semantics."""
    B, C, H, W = x.shape
    P = patch_size
    E = conv_w.shape[0]
    out = jax.lax.conv_general_dilated(
        x, conv_w, window_strides=(P, P), padding="VALID",
        dimension_numbers=("NCHW", "OIHW", "NCHW"),
    ) + conv_b.reshape(1, E, 1, 1)
    Hp, Wp = out.shape[2], out.shape[3]
    out = out.reshape(B, E, Hp * Wp).transpose(0, 2, 1)            # b (h w) e
    cls = jnp.broadcast_to(cls_token, (B, 1, E))
    out = jnp.concatenate([cls, out], axis=1)
    return out + pos[None, :, :]


if __name__ == "__main__":
    # Small correctness-only shapes (tune at real ViT scale: N=196, K=768, E=768).
    B, C, P, E, IMG = 2, 4, 8, 128, 32
    N = (IMG // P) ** 2  # 16 patches -> seq len 17

    key = jax.random.PRNGKey(0)
    k_x, k_w, k_b, k_cls, k_pos = jax.random.split(key, 5)

    x = jax.random.normal(k_x, (B, C, IMG, IMG), dtype=jnp.float32)
    conv_w = jax.random.normal(k_w, (E, C, P, P), dtype=jnp.float32) * 0.05
    conv_b = jax.random.normal(k_b, (E,), dtype=jnp.float32) * 0.2
    cls_token = jax.random.normal(k_cls, (1, 1, E), dtype=jnp.float32)
    pos = jax.random.normal(k_pos, (N + 1, E), dtype=jnp.float32)

    out = patch_embedding_forward(x, conv_w, conv_b, cls_token, pos, P)
    out = jax.block_until_ready(out)

    ref = reference_forward(x, conv_w, conv_b, cls_token, pos, P)
    assert out.shape == (B, N + 1, E), out.shape
    out_f32 = out.astype(jnp.float32)
    max_err = jnp.max(jnp.abs(out_f32 - ref))
    # bf16 matmul operands + bf16 output tokens (f32 accumulate / f32 add) ->
    # small rounding vs the f32 reference.
    assert jnp.allclose(out_f32, ref, atol=1e-1, rtol=5e-2), (
        f"mismatch vs reference (max err {max_err})")

    print("KERNEL_OK")
</pallas_src>

<mosaic_0001>
module attributes {stable_mosaic.version = 11 : i64} {
  func.func @patch_embed_kernel(%arg0: i32, %arg1: memref<2x17x256xbf16, #tpu.memory_space<vmem>>, %arg2: memref<256x128xbf16, #tpu.memory_space<vmem>>, %arg3: memref<17x128xf32, #tpu.memory_space<vmem>>, %arg4: memref<2x17x128xbf16, #tpu.memory_space<vmem>>) attributes {dimension_semantics = [#tpu.dimension_semantics<parallel>], iteration_bounds = array<i64: 1>, scalar_prefetch = 0 : i64, scratch_operands = 0 : i64, tpu.core_type = #tpu.core_type<tc>, window_params = [{transform_indices = @transform_0, window_bounds = array<i64: 2, 17, 256>}, {pipeline_mode = #tpu.pipeline_mode<synchronous>, transform_indices = @transform_1, window_bounds = array<i64: 256, 128>}, {pipeline_mode = #tpu.pipeline_mode<synchronous>, transform_indices = @transform_2, window_bounds = array<i64: 17, 128>}, {transform_indices = @transform_3, window_bounds = array<i64: 2, 17, 128>}]} {
    %c0 = arith.constant 0 : index
    %c0_0 = arith.constant 0 : index
    %c0_1 = arith.constant 0 : index
    %0 = vector.load %arg1[%c0, %c0_0, %c0_1] : memref<2x17x256xbf16, #tpu.memory_space<vmem>>, vector<2x17x256xbf16>
    %c0_2 = arith.constant 0 : index
    %c0_3 = arith.constant 0 : index
    %1 = vector.load %arg2[%c0_2, %c0_3] : memref<256x128xbf16, #tpu.memory_space<vmem>>, vector<256x128xbf16>
    "tpu.trace_start"() <{level = 10 : i32, message = "bnk,ke->bne"}> : () -> ()
    %cst = arith.constant dense<0.000000e+00> : vector<2x17x128xf32>
    %2 = tpu.matmul %0, %1, %cst {dimension_numbers = #tpu.dot_dimension_numbers<[2], [0], [0, 1], [1], [0, 0, 0, 1, 1, 1], [], []>} : vector<2x17x256xbf16>, vector<256x128xbf16>, vector<2x17x128xf32> -> vector<2x17x128xf32>
    "tpu.trace_stop"() : () -> ()
    %c0_4 = arith.constant 0 : index
    %c0_5 = arith.constant 0 : index
    %3 = vector.load %arg3[%c0_4, %c0_5] : memref<17x128xf32, #tpu.memory_space<vmem>>, vector<17x128xf32>
    %4 = vector.shape_cast %3 : vector<17x128xf32> to vector<1x17x128xf32>
    %5 = vector.broadcast %4 : vector<1x17x128xf32> to vector<2x17x128xf32>
    %6 = arith.addf %2, %5 : vector<2x17x128xf32>
    %7 = arith.truncf %6 : vector<2x17x128xf32> to vector<2x17x128xbf16>
    %c0_6 = arith.constant 0 : index
    %c0_7 = arith.constant 0 : index
    %c0_8 = arith.constant 0 : index
    %8 = vector.load %arg4[%c0_6, %c0_7, %c0_8] : memref<2x17x128xbf16, #tpu.memory_space<vmem>>, vector<2x17x128xbf16>
    tpu.vector_store %arg4[%c0_6, %c0_7, %c0_8], %7 {strides = array<i32>} : memref<2x17x128xbf16, #tpu.memory_space<vmem>>, vector<2x17x128xbf16>,
    return
  }
  func.func @transform_0(%arg0: i32) -> (i32, i32, i32) {
    %c0_i32 = arith.constant 0 : i32
    %c0_i32_0 = arith.constant 0 : i32
    %c0_i32_1 = arith.constant 0 : i32
    return %arg0, %c0_i32, %c0_i32_0 : i32, i32, i32
  }
  func.func @transform_1(%arg0: i32) -> (i32, i32) {
    %c0_i32 = arith.constant 0 : i32
    %c0_i32_0 = arith.constant 0 : i32
    %c0_i32_1 = arith.constant 0 : i32
    return %c0_i32, %c0_i32_0 : i32, i32
  }
  func.func @transform_2(%arg0: i32) -> (i32, i32) {
    %c0_i32 = arith.constant 0 : i32
    %c0_i32_0 = arith.constant 0 : i32
    %c0_i32_1 = arith.constant 0 : i32
    return %c0_i32, %c0_i32_0 : i32, i32
  }
  func.func @transform_3(%arg0: i32) -> (i32, i32, i32) {
    %c0_i32 = arith.constant 0 : i32
    %c0_i32_0 = arith.constant 0 : i32
    %c0_i32_1 = arith.constant 0 : i32
    return %arg0, %c0_i32, %c0_i32_0 : i32, i32, i32
  }
}

</mosaic_0001>

<llo_original>
// kernel: patch_embedding_forward.1
$region0: #{patch_embedding_forward.1}
  #allocation0 [shape = 'u32[]', space=smem, size = 0x4, offset = 0x4, fixed_abs, tag = 'smem constant byte address 0x4 - core index']
  #allocation1 [shape = 'u32[144,128]{1,0:T(1,128)}', space=vmem, size = 0x12000, scoped, tag = 'internal scratch']
  %s0 = inlined_call_operand.vmem [shape: bf16[2,17,256], index: 0, kind: input, shape index: {}]
  %s1 = inlined_call_operand.vmem [shape: bf16[256,128], index: 1, kind: input, shape index: {}]
  %s2 = inlined_call_operand.vmem [shape: f32[17,128], index: 2, kind: input, shape index: {}]
  %s3 = inlined_call_operand.vmem [shape: bf16[2,17,128], index: 3, kind: output, shape index: {}]
  %s4 = sld [smem:[#allocation0]]
  $region22: #{patch_embedding_forward.1} parent=0
    _
  %s6 = ssub.s32 1, %s4
  %s7 = scalar_select 0, %s6, %s4
  // Predicated region
  $region2: #{patch_embedding_forward.1} parent=0 // pred_check
    _
  $region3: #{patch_embedding_forward.1} parent=0 // pred_check_branch
    %9 = sbr.rel (0) target = $region5
  $region4: #{patch_embedding_forward.1} parent=0 // pred_region
    _
  $region5: #{patch_embedding_forward.1} parent=0 // pred_fallthru
    _
  // Predicated region
  $region6: #{patch_embedding_forward.1} parent=0 // pred_check
    _
  $region7: #{patch_embedding_forward.1} parent=0 // pred_check_branch
    %11 = sbr.rel (0) target = $region9
  $region8: #{patch_embedding_forward.1} parent=0 // pred_region
    _
  $region9: #{patch_embedding_forward.1} parent=0 // pred_fallthru
    _
  // Predicated region
  $region10: #{patch_embedding_forward.1} parent=0 // pred_check
    _
  $region11: #{patch_embedding_forward.1} parent=0 // pred_check_branch
    %13 = sbr.rel (0) target = $region13
  $region12: #{patch_embedding_forward.1} parent=0 // pred_region
    _
  $region13: #{patch_embedding_forward.1} parent=0 // pred_fallthru
    _
  %v15 = vld [vmem:[%s0] sm:$0xff]
  %v16 = vld [vmem:[%s0 + $0x8] sm:$0xff]
  %v17 = vld [vmem:[%s0 + $0x10] sm:$0x11]
  %v18 = vld [vmem:[%s0 + $0x18] sm:$0xff]
  %v19 = vld [vmem:[%s0 + $0x20] sm:$0xff]
  %v20 = vld [vmem:[%s0 + $0x28] sm:$0x11]
  %v21 = vld [vmem:[%s1] sm:$0xf]
  %v22 = vld [vmem:[%s1 + $0x4] sm:$0xf]
  %v23 = vld [vmem:[%s1 + $0x8] sm:$0xf]
  %v24 = vld [vmem:[%s1 + $0xc] sm:$0xf]
  %v25 = vld [vmem:[%s1 + $0x10] sm:$0xf]
  %v26 = vld [vmem:[%s1 + $0x14] sm:$0xf]
  %v27 = vld [vmem:[%s1 + $0x18] sm:$0xf]
  %v28 = vld [vmem:[%s1 + $0x1c] sm:$0xf]
  %v29 = vld [vmem:[%s1 + $0x20] sm:$0xf]
  %v30 = vld [vmem:[%s1 + $0x24] sm:$0xf]
  %v31 = vld [vmem:[%s1 + $0x28] sm:$0xf]
  %v32 = vld [vmem:[%s1 + $0x2c] sm:$0xf]
  %v33 = vld [vmem:[%s1 + $0x30] sm:$0xf]
  %v34 = vld [vmem:[%s1 + $0x34] sm:$0xf]
  %v35 = vld [vmem:[%s1 + $0x38] sm:$0xf]
  %v36 = vld [vmem:[%s1 + $0x3c] sm:$0xf]
  %v37 = vld [vmem:[%s1 + $0x40] sm:$0xf]
  %v38 = vld [vmem:[%s1 + $0x44] sm:$0xf]
  %v39 = vld [vmem:[%s1 + $0x48] sm:$0xf]
  %v40 = vld [vmem:[%s1 + $0x4c] sm:$0xf]
  %v41 = vld [vmem:[%s1 + $0x50] sm:$0xf]
  %v42 = vld [vmem:[%s1 + $0x54] sm:$0xf]
  %v43 = vld [vmem:[%s1 + $0x58] sm:$0xf]
  %v44 = vld [vmem:[%s1 + $0x5c] sm:$0xf]
  %v45 = vld [vmem:[%s1 + $0x60] sm:$0xf]
  %v46 = vld [vmem:[%s1 + $0x64] sm:$0xf]
  %v47 = vld [vmem:[%s1 + $0x68] sm:$0xf]
  %v48 = vld [vmem:[%s1 + $0x6c] sm:$0xf]
  %v49 = vld [vmem:[%s1 + $0x70] sm:$0xf]
  %v50 = vld [vmem:[%s1 + $0x74] sm:$0xf]
  %v51 = vld [vmem:[%s1 + $0x78] sm:$0xf]
  %v52 = vld [vmem:[%s1 + $0x7c] sm:$0xf]
  %v53 = vld [vmem:[%s2] sm:$0xff]
  %v54 = vld [vmem:[%s2 + $0x8] sm:$0xff]
  %v55 = vld [vmem:[%s2 + $0x10] sm:$0x1]
  %v63 = vunpack.c.l.s4 1966171168
  %v64 = vunpack.c.0.s8 %v63
  %v65 = vlaneseq
  %v66 = vshrl.u32 %v65, 7
  %v67 = vsub.s32 %v64, %v66
  %v68 = vrot.slane %v15, %v67
  %v69 = vcombine.high %v68, %v68
  %v71 = vunpack.c.l.s4 1966171168
  %v72 = vunpack.c.0.s8 %v71
  %v73 = vlaneseq
  %v74 = vshrl.u32 %v73, 7
  %v75 = vsub.s32 %v72, %v74
  %v76 = vrot.slane %v68, %v75
  %v78 = vunpack.c.l.s4 1966171168
  %v79 = vunpack.c.0.s8 %v78
  %v80 = vlaneseq
  %v81 = vshrl.u32 %v80, 7
  %v82 = vsub.s32 %v79, %v81
  %v83 = vrot.slane %v69, %v82
  %v84 = vcombine.high %v76, %v76
  %v85 = vcombine.high %v83, %v83
  %v87 = vunpack.c.l.s4 1966171168
  %v88 = vunpack.c.0.s8 %v87
  %v89 = vlaneseq
  %v90 = vshrl.u32 %v89, 7
  %v91 = vsub.s32 %v88, %v90
  %v92 = vrot.slane %v16, %v91
  %v93 = vcombine.high %v92, %v92
  %v95 = vunpack.c.l.s4 1966171168
  %v96 = vunpack.c.0.s8 %v95
  %v97 = vlaneseq
  %v98 = vshrl.u32 %v97, 7
  %v99 = vsub.s32 %v96, %v98
  %v100 = vrot.slane %v92, %v99
  %v102 = vunpack.c.l.s4 1966171168
  %v103 = vunpack.c.0.s8 %v102
  %v104 = vlaneseq
  %v105 = vshrl.u32 %v104, 7
  %v106 = vsub.s32 %v103, %v105
  %v107 = vrot.slane %v93, %v106
  %v108 = vcombine.high %v100, %v100
  %v109 = vcombine.high %v107, %v107
  %v111 = vunpack.c.l.s4 1966171168
  %v112 = vunpack.c.0.s8 %v111
  %v113 = vlaneseq
  %v114 = vshrl.u32 %v113, 7
  %v115 = vsub.s32 %v112, %v114
  %v116 = vrot.slane %v17, %v115
  %v118 = vunpack.c.l.s4 1966171168
  %v119 = vunpack.c.0.s8 %v118
  %v120 = vlaneseq
  %v121 = vshrl.u32 %v120, 7
  %v122 = vsub.s32 %v119, %v121
  %v123 = vrot.slane %v116, %v122
  %v125 = vunpack.c.l.s4 1966171168
  %v126 = vunpack.c.0.s8 %v125
  %v127 = vlaneseq
  %v128 = vshrl.u32 %v127, 7
  %v129 = vsub.s32 %v126, %v128
  %v130 = vrot.slane %v18, %v129
  %v131 = vcombine.high %v130, %v130
  %v133 = vunpack.c.l.s4 1966171168
  %v134 = vunpack.c.0.s8 %v133
  %v135 = vlaneseq
  %v136 = vshrl.u32 %v135, 7
  %v137 = vsub.s32 %v134, %v136
  %v138 = vrot.slane %v130, %v137
  %v140 = vunpack.c.l.s4 1966171168
  %v141 = vunpack.c.0.s8 %v140
  %v142 = vlaneseq
  %v143 = vshrl.u32 %v142, 7
  %v144 = vsub.s32 %v141, %v143
  %v145 = vrot.slane %v131, %v144
  %v146 = vcombine.high %v138, %v138
  %v147 = vcombine.high %v145, %v145
  %v149 = vunpack.c.l.s4 1966171168
  %v150 = vunpack.c.0.s8 %v149
  %v151 = vlaneseq
  %v152 = vshrl.u32 %v151, 7
  %v153 = vsub.s32 %v150, %v152
  %v154 = vrot.slane %v19, %v153
  %v155 = vcombine.high %v154, %v154
  %v157 = vunpack.c.l.s4 1966171168
  %v158 = vunpack.c.0.s8 %v157
  %v159 = vlaneseq
  %v160 = vshrl.u32 %v159, 7
  %v161 = vsub.s32 %v158, %v160
  %v162 = vrot.slane %v154, %v161
  %v164 = vunpack.c.l.s4 1966171168
  %v165 = vunpack.c.0.s8 %v164
  %v166 = vlaneseq
  %v167 = vshrl.u32 %v166, 7
  %v168 = vsub.s32 %v165, %v167
  %v169 = vrot.slane %v155, %v168
  %v170 = vcombine.high %v162, %v162
  %v171 = vcombine.high %v169, %v169
  %v173 = vunpack.c.l.s4 1966171168
  %v174 = vunpack.c.0.s8 %v173
  %v175 = vlaneseq
  %v176 = vshrl.u32 %v175, 7
  %v177 = vsub.s32 %v174, %v176
  %v178 = vrot.slane %v20, %v177
  %v180 = vunpack.c.l.s4 1966171168
  %v181 = vunpack.c.0.s8 %v180
  %v182 = vlaneseq
  %v183 = vshrl.u32 %v182, 7
  %v184 = vsub.s32 %v181, %v183
  %v185 = vrot.slane %v178, %v184
  %v186 = vunpack.i.l.s16 %v76
  %v187 = vunpack.i.h.s16 %v76
  %v188 = vunpack.i.l.s16 %v83
  %v189 = vunpack.i.h.s16 %v83
  %v190 = vunpack.i.l.s16 %v84
  %v191 = vunpack.i.h.s16 %v84
  %v192 = vunpack.i.l.s16 %v85
  %v193 = vunpack.i.h.s16 %v85
  %v194 = vunpack.i.l.s16 %v100
  %v195 = vunpack.i.h.s16 %v100
  %v196 = vunpack.i.l.s16 %v107
  %v197 = vunpack.i.h.s16 %v107
  %v198 = vunpack.i.l.s16 %v108
  %v199 = vunpack.i.h.s16 %v108
  %v200 = vunpack.i.l.s16 %v109
  %v201 = vunpack.i.h.s16 %v109
  %v202 = vunpack.i.l.s16 %v123
  %v203 = vunpack.i.l.s16 %v138
  %v204 = vunpack.i.h.s16 %v138
  %v205 = vunpack.i.l.s16 %v145
  %v206 = vunpack.i.h.s16 %v145
  %v207 = vunpack.i.l.s16 %v146
  %v208 = vunpack.i.h.s16 %v146
  %v209 = vunpack.i.l.s16 %v147
  %v210 = vunpack.i.h.s16 %v147
  %v211 = vunpack.i.l.s16 %v162
  %v212 = vunpack.i.h.s16 %v162
  %v213 = vunpack.i.l.s16 %v169
  %v214 = vunpack.i.h.s16 %v169
  %v215 = vunpack.i.l.s16 %v170
  %v216 = vunpack.i.h.s16 %v170
  %v217 = vunpack.i.l.s16 %v171
  %v218 = vunpack.i.h.s16 %v171
  %v219 = vunpack.i.l.s16 %v185
  %v223 = vcombine.high %v53, %v53
  %v225 = vunpack.c.l.s4 1966171168
  %v226 = vunpack.c.0.s8 %v225
  %v227 = vlaneseq
  %v228 = vshrl.u32 %v227, 7
  %v229 = vsub.s32 %v226, %v228
  %v230 = vrot.slane %v53, %v229
  %v232 = vunpack.c.l.s4 1966171168
  %v233 = vunpack.c.0.s8 %v232
  %v234 = vlaneseq
  %v235 = vshrl.u32 %v234, 7
  %v236 = vsub.s32 %v233, %v235
  %v237 = vrot.slane %v223, %v236
  %v238 = vcombine.high %v230, %v230
  %v239 = vcombine.high %v237, %v237
  %v241 = vunpack.c.l.s4 1966171168
  %v242 = vunpack.c.0.s8 %v241
  %v243 = vlaneseq
  %v244 = vshrl.u32 %v243, 7
  %v245 = vsub.s32 %v242, %v244
  %v246 = vrot.slane %v230, %v245
  %v248 = vunpack.c.l.s4 1966171168
  %v249 = vunpack.c.0.s8 %v248
  %v250 = vlaneseq
  %v251 = vshrl.u32 %v250, 7
  %v252 = vsub.s32 %v249, %v251
  %v253 = vrot.slane %v237, %v252
  %v255 = vunpack.c.l.s4 1966171168
  %v256 = vunpack.c.0.s8 %v255
  %v257 = vlaneseq
  %v258 = vshrl.u32 %v257, 7
  %v259 = vsub.s32 %v256, %v258
  %v260 = vrot.slane %v238, %v259
  %v262 = vunpack.c.l.s4 1966171168
  %v263 = vunpack.c.0.s8 %v262
  %v264 = vlaneseq
  %v265 = vshrl.u32 %v264, 7
  %v266 = vsub.s32 %v263, %v265
  %v267 = vrot.slane %v239, %v266
  %v268 = vcombine.high %v246, %v246
  %v269 = vcombine.high %v253, %v253
  %v270 = vcombine.high %v260, %v260
  %v271 = vcombine.high %v267, %v267
  %v272 = vcombine.high %v54, %v54
  %v274 = vunpack.c.l.s4 1966171168
  %v275 = vunpack.c.0.s8 %v274
  %v276 = vlaneseq
  %v277 = vshrl.u32 %v276, 7
  %v278 = vsub.s32 %v275, %v277
  %v279 = vrot.slane %v54, %v278
  %v281 = vunpack.c.l.s4 1966171168
  %v282 = vunpack.c.0.s8 %v281
  %v283 = vlaneseq
  %v284 = vshrl.u32 %v283, 7
  %v285 = vsub.s32 %v282, %v284
  %v286 = vrot.slane %v272, %v285
  %v287 = vcombine.high %v279, %v279
  %v288 = vcombine.high %v286, %v286
  %v290 = vunpack.c.l.s4 1966171168
  %v291 = vunpack.c.0.s8 %v290
  %v292 = vlaneseq
  %v293 = vshrl.u32 %v292, 7
  %v294 = vsub.s32 %v291, %v293
  %v295 = vrot.slane %v279, %v294
  %v297 = vunpack.c.l.s4 1966171168
  %v298 = vunpack.c.0.s8 %v297
  %v299 = vlaneseq
  %v300 = vshrl.u32 %v299, 7
  %v301 = vsub.s32 %v298, %v300
  %v302 = vrot.slane %v286, %v301
  %v304 = vunpack.c.l.s4 1966171168
  %v305 = vunpack.c.0.s8 %v304
  %v306 = vlaneseq
  %v307 = vshrl.u32 %v306, 7
  %v308 = vsub.s32 %v305, %v307
  %v309 = vrot.slane %v287, %v308
  %v311 = vunpack.c.l.s4 1966171168
  %v312 = vunpack.c.0.s8 %v311
  %v313 = vlaneseq
  %v314 = vshrl.u32 %v313, 7
  %v315 = vsub.s32 %v312, %v314
  %v316 = vrot.slane %v288, %v315
  %v317 = vcombine.high %v295, %v295
  %v318 = vcombine.high %v302, %v302
  %v319 = vcombine.high %v309, %v309
  %v320 = vcombine.high %v316, %v316
  %v322 = vunpack.c.l.s4 1966171168
  %v323 = vunpack.c.0.s8 %v322
  %v324 = vlaneseq
  %v325 = vshrl.u32 %v324, 7
  %v326 = vsub.s32 %v323, %v325
  %v327 = vrot.slane %v55, %v326
  %v329 = vunpack.c.l.s4 1966171168
  %v330 = vunpack.c.0.s8 %v329
  %v331 = vlaneseq
  %v332 = vshrl.u32 %v331, 7
  %v333 = vsub.s32 %v330, %v332
  %v334 = vrot.slane %v327, %v333
  %v335 = vpack.i.b16 %v187, %v186
  %v336 = vpack.i.b16 %v189, %v188
  %v337 = vpack.i.b16 %v191, %v190
  %v338 = vpack.i.b16 %v193, %v192
  %v339 = vpack.i.b16 %v195, %v194
  %v340 = vpack.i.b16 %v197, %v196
  %v341 = vpack.i.b16 %v199, %v198
  %v342 = vpack.i.b16 %v201, %v200
  %v343 = vpack.i.b16 %v203, %v202
  %v344 = vpack.i.b16 %v205, %v204
  %v345 = vpack.i.b16 %v207, %v206
  %v346 = vpack.i.b16 %v209, %v208
  %v347 = vpack.i.b16 %v211, %v210
  %v348 = vpack.i.b16 %v213, %v212
  %v349 = vpack.i.b16 %v215, %v214
  %v350 = vpack.i.b16 %v217, %v216
  %v351 = vpack.i.b16 %v219, %v218
  %v352 = vcombine.low %v335, %v336
  %v353 = vcombine.low %v337, %v338
  %v354 = vcombine.low %v339, %v340
  %v355 = vcombine.low %v341, %v342
  %v357 = vunpack.c.l.s4 1966171168
  %v358 = vunpack.c.0.s8 %v357
  %v359 = vlaneseq
  %v360 = vshrl.u32 %v359, 7
  %v361 = vsub.s32 %v358, %v360
  %v362 = vrot.slane %v352, %v361
  %v364 = vunpack.c.l.s4 1966171168
  %v365 = vunpack.c.0.s8 %v364
  %v366 = vlaneseq
  %v367 = vshrl.u32 %v366, 7
  %v368 = vsub.s32 %v365, %v367
  %v369 = vrot.slane %v353, %v368
  %v371 = vunpack.c.l.s4 1966171168
  %v372 = vunpack.c.0.s8 %v371
  %v373 = vlaneseq
  %v374 = vshrl.u32 %v373, 7
  %v375 = vsub.s32 %v372, %v374
  %v376 = vrot.slane %v354, %v375
  %v378 = vunpack.c.l.s4 1966171168
  %v379 = vunpack.c.0.s8 %v378
  %v380 = vlaneseq
  %v381 = vshrl.u32 %v380, 7
  %v382 = vsub.s32 %v379, %v381
  %v383 = vrot.slane %v355, %v382
  %v384 = vcombine.low %v362, %v369
  %v385 = vcombine.high %v362, %v369
  %v386 = vcombine.low %v376, %v383
  %v387 = vcombine.high %v376, %v383
  %v389 = vunpack.c.l.s4 1966171168
  %v390 = vunpack.c.0.s8 %v389
  %v391 = vlaneseq
  %v392 = vshrl.u32 %v391, 7
  %v393 = vsub.s32 %v390, %v392
  %v394 = vrot.slane %v384, %v393
  %v396 = vunpack.c.l.s4 1966171168
  %v397 = vunpack.c.0.s8 %v396
  %v398 = vlaneseq
  %v399 = vshrl.u32 %v398, 7
  %v400 = vsub.s32 %v397, %v399
  %v401 = vrot.slane %v385, %v400
  %v403 = vunpack.c.l.s4 1966171168
  %v404 = vunpack.c.0.s8 %v403
  %v405 = vlaneseq
  %v406 = vshrl.u32 %v405, 7
  %v407 = vsub.s32 %v404, %v406
  %v408 = vrot.slane %v386, %v407
  %v410 = vunpack.c.l.s4 1966171168
  %v411 = vunpack.c.0.s8 %v410
  %v412 = vlaneseq
  %v413 = vshrl.u32 %v412, 7
  %v414 = vsub.s32 %v411, %v413
  %v415 = vrot.slane %v387, %v414
  %v416 = vcombine.low %v394, %v408
  %v417 = vcombine.low %v401, %v415
  %v418 = vcombine.low %v343, %v344
  %v419 = vcombine.low %v345, %v346
  %v420 = vcombine.low %v347, %v348
  %v421 = vcombine.low %v349, %v350
  %v423 = vunpack.c.l.s4 1966171168
  %v424 = vunpack.c.0.s8 %v423
  %v425 = vlaneseq
  %v426 = vshrl.u32 %v425, 7
  %v427 = vsub.s32 %v424, %v426
  %v428 = vrot.slane %v418, %v427
  %v430 = vunpack.c.l.s4 1966171168
  %v431 = vunpack.c.0.s8 %v430
  %v432 = vlaneseq
  %v433 = vshrl.u32 %v432, 7
  %v434 = vsub.s32 %v431, %v433
  %v435 = vrot.slane %v419, %v434
  %v437 = vunpack.c.l.s4 1966171168
  %v438 = vunpack.c.0.s8 %v437
  %v439 = vlaneseq
  %v440 = vshrl.u32 %v439, 7
  %v441 = vsub.s32 %v438, %v440
  %v442 = vrot.slane %v420, %v441
  %v444 = vunpack.c.l.s4 1966171168
  %v445 = vunpack.c.0.s8 %v444
  %v446 = vlaneseq
  %v447 = vshrl.u32 %v446, 7
  %v448 = vsub.s32 %v445, %v447
  %v449 = vrot.slane %v421, %v448
  %v450 = vcombine.low %v428, %v435
  %v451 = vcombine.high %v428, %v435
  %v452 = vcombine.low %v442, %v449
  %v453 = vcombine.high %v442, %v449
  %v455 = vunpack.c.l.s4 1966171168
  %v456 = vunpack.c.0.s8 %v455
  %v457 = vlaneseq
  %v458 = vshrl.u32 %v457, 7
  %v459 = vsub.s32 %v456, %v458
  %v460 = vrot.slane %v450, %v459
  %v462 = vunpack.c.l.s4 1966171168
  %v463 = vunpack.c.0.s8 %v462
  %v464 = vlaneseq
  %v465 = vshrl.u32 %v464, 7
  %v466 = vsub.s32 %v463, %v465
  %v467 = vrot.slane %v451, %v466
  %v469 = vunpack.c.l.s4 1966171168
  %v470 = vunpack.c.0.s8 %v469
  %v471 = vlaneseq
  %v472 = vshrl.u32 %v471, 7
  %v473 = vsub.s32 %v470, %v472
  %v474 = vrot.slane %v452, %v473
  %v476 = vunpack.c.l.s4 1966171168
  %v477 = vunpack.c.0.s8 %v476
  %v478 = vlaneseq
  %v479 = vshrl.u32 %v478, 7
  %v480 = vsub.s32 %v477, %v479
  %v481 = vrot.slane %v453, %v480
  %v482 = vcombine.low %v460, %v474
  %v483 = vcombine.low %v467, %v481
  %v485 = vunpack.c.l.s4 1966171168
  %v486 = vunpack.c.0.s8 %v485
  %v487 = vlaneseq
  %v488 = vshrl.u32 %v487, 7
  %v489 = vsub.s32 %v486, %v488
  %v490 = vrot.slane %v351, %v489
  %v491 = vcombine.high %v490, %v490
  %v493 = vunpack.c.l.s4 1966171168
  %v494 = vunpack.c.0.s8 %v493
  %v495 = vlaneseq
  %v496 = vshrl.u32 %v495, 7
  %v497 = vsub.s32 %v494, %v496
  %v498 = vrot.slane %v490, %v497
  %v500 = vunpack.c.l.s4 1966171168
  %v501 = vunpack.c.0.s8 %v500
  %v502 = vlaneseq
  %v503 = vshrl.u32 %v502, 7
  %v504 = vsub.s32 %v501, %v503
  %v505 = vrot.slane %v491, %v504
  %v544 = vunpack.c.l.b16 %v21
  %v545 = vunpack.c.l.b16 %v22
  %v546 = vunpack.c.l.b16 %v23
  %v547 = vunpack.c.l.b16 %v24
  %v548 = vunpack.c.l.b16 %v25
  %v549 = vunpack.c.l.b16 %v26
  %v550 = vunpack.c.l.b16 %v27
  %v551 = vunpack.c.l.b16 %v28
  %v552 = vunpack.c.l.b16 %v29
  %v553 = vunpack.c.l.b16 %v30
  %v554 = vunpack.c.l.b16 %v31
  %v555 = vunpack.c.l.b16 %v32
  %v556 = vunpack.c.l.b16 %v33
  %v557 = vunpack.c.l.b16 %v34
  %v558 = vunpack.c.l.b16 %v35
  %v559 = vunpack.c.l.b16 %v36
  %v560 = vunpack.c.l.b16 %v37
  %v561 = vunpack.c.l.b16 %v38
  %v562 = vunpack.c.l.b16 %v39
  %v563 = vunpack.c.l.b16 %v40
  %v564 = vunpack.c.l.b16 %v41
  %v565 = vunpack.c.l.b16 %v42
  %v566 = vunpack.c.l.b16 %v43
  %v567 = vunpack.c.l.b16 %v44
  %v568 = vunpack.c.l.b16 %v45
  %v569 = vunpack.c.l.b16 %v46
  %v570 = vunpack.c.l.b16 %v47
  %v571 = vunpack.c.l.b16 %v48
  %v572 = vunpack.c.l.b16 %v49
  %v573 = vunpack.c.l.b16 %v50
  %v574 = vunpack.c.l.b16 %v51
  %v575 = vunpack.c.l.b16 %v52
  %v576 = vpack.c.b16 %v545, %v544
  %v577 = vpack.c.b16 %v547, %v546
  %v578 = vpack.c.b16 %v549, %v548
  %v579 = vpack.c.b16 %v551, %v550
  %v580 = vpack.c.b16 %v553, %v552
  %v581 = vpack.c.b16 %v555, %v554
  %v582 = vpack.c.b16 %v557, %v556
  %v583 = vpack.c.b16 %v559, %v558
  %v584 = vpack.c.b16 %v561, %v560
  %v585 = vpack.c.b16 %v563, %v562
  %v586 = vpack.c.b16 %v565, %v564
  %v587 = vpack.c.b16 %v567, %v566
  %v588 = vpack.c.b16 %v569, %v568
  %v589 = vpack.c.b16 %v571, %v570
  %v590 = vpack.c.b16 %v573, %v572
  %v591 = vpack.c.b16 %v575, %v574
  %v608 = vcombine.low %v246, %v260
  %v609 = vcombine.low %v268, %v270
  %v610 = vcombine.low %v253, %v267
  %v611 = vcombine.low %v269, %v271
  %v613 = vunpack.c.l.s4 1966171168
  %v614 = vunpack.c.0.s8 %v613
  %v615 = vlaneseq
  %v616 = vshrl.u32 %v615, 7
  %v617 = vsub.s32 %v614, %v616
  %v618 = vrot.slane %v608, %v617
  %v620 = vunpack.c.l.s4 1966171168
  %v621 = vunpack.c.0.s8 %v620
  %v622 = vlaneseq
  %v623 = vshrl.u32 %v622, 7
  %v624 = vsub.s32 %v621, %v623
  %v625 = vrot.slane %v609, %v624
  %v627 = vunpack.c.l.s4 1966171168
  %v628 = vunpack.c.0.s8 %v627
  %v629 = vlaneseq
  %v630 = vshrl.u32 %v629, 7
  %v631 = vsub.s32 %v628, %v630
  %v632 = vrot.slane %v610, %v631
  %v634 = vunpack.c.l.s4 1966171168
  %v635 = vunpack.c.0.s8 %v634
  %v636 = vlaneseq
  %v637 = vshrl.u32 %v636, 7
  %v638 = vsub.s32 %v635, %v637
  %v639 = vrot.slane %v611, %v638
  %v640 = vcombine.low %v618, %v625
  %v641 = vcombine.low %v632, %v639
  %v643 = vunpack.c.l.s4 1966171168
  %v644 = vunpack.c.0.s8 %v643
  %v645 = vlaneseq
  %v646 = vshrl.u32 %v645, 7
  %v647 = vsub.s32 %v644, %v646
  %v648 = vrot.slane %v640, %v647
  %v650 = vunpack.c.l.s4 1966171168
  %v651 = vunpack.c.0.s8 %v650
  %v652 = vlaneseq
  %v653 = vshrl.u32 %v652, 7
  %v654 = vsub.s32 %v651, %v653
  %v655 = vrot.slane %v641, %v654
  %v656 = vcombine.low %v648, %v655
  %v657 = vcombine.low %v295, %v309
  %v658 = vcombine.low %v317, %v319
  %v659 = vcombine.low %v302, %v316
  %v660 = vcombine.low %v318, %v320
  %v662 = vunpack.c.l.s4 1966171168
  %v663 = vunpack.c.0.s8 %v662
  %v664 = vlaneseq
  %v665 = vshrl.u32 %v664, 7
  %v666 = vsub.s32 %v663, %v665
  %v667 = vrot.slane %v657, %v666
  %v669 = vunpack.c.l.s4 1966171168
  %v670 = vunpack.c.0.s8 %v669
  %v671 = vlaneseq
  %v672 = vshrl.u32 %v671, 7
  %v673 = vsub.s32 %v670, %v672
  %v674 = vrot.slane %v658, %v673
  %v676 = vunpack.c.l.s4 1966171168
  %v677 = vunpack.c.0.s8 %v676
  %v678 = vlaneseq
  %v679 = vshrl.u32 %v678, 7
  %v680 = vsub.s32 %v677, %v679
  %v681 = vrot.slane %v659, %v680
  %v683 = vunpack.c.l.s4 1966171168
  %v684 = vunpack.c.0.s8 %v683
  %v685 = vlaneseq
  %v686 = vshrl.u32 %v685, 7
  %v687 = vsub.s32 %v684, %v686
  %v688 = vrot.slane %v660, %v687
  %v689 = vcombine.low %v667, %v674
  %v690 = vcombine.low %v681, %v688
  %v692 = vunpack.c.l.s4 1966171168
  %v693 = vunpack.c.0.s8 %v692
  %v694 = vlaneseq
  %v695 = vshrl.u32 %v694, 7
  %v696 = vsub.s32 %v693, %v695
  %v697 = vrot.slane %v689, %v696
  %v699 = vunpack.c.l.s4 1966171168
  %v700 = vunpack.c.0.s8 %v699
  %v701 = vlaneseq
  %v702 = vshrl.u32 %v701, 7
  %v703 = vsub.s32 %v700, %v702
  %v704 = vrot.slane %v690, %v703
  %v705 = vcombine.low %v697, %v704
  %v706 = vcombine.low %v334, %v246
  %v707 = vcombine.low %v260, %v268
  %v708 = vcombine.low %v270, %v253
  %v709 = vcombine.low %v267, %v269
  %v711 = vunpack.c.l.s4 1966171168
  %v712 = vunpack.c.0.s8 %v711
  %v713 = vlaneseq
  %v714 = vshrl.u32 %v713, 7
  %v715 = vsub.s32 %v712, %v714
  %v716 = vrot.slane %v706, %v715
  %v718 = vunpack.c.l.s4 1966171168
  %v719 = vunpack.c.0.s8 %v718
  %v720 = vlaneseq
  %v721 = vshrl.u32 %v720, 7
  %v722 = vsub.s32 %v719, %v721
  %v723 = vrot.slane %v707, %v722
  %v725 = vunpack.c.l.s4 1966171168
  %v726 = vunpack.c.0.s8 %v725
  %v727 = vlaneseq
  %v728 = vshrl.u32 %v727, 7
  %v729 = vsub.s32 %v726, %v728
  %v730 = vrot.slane %v708, %v729
  %v732 = vunpack.c.l.s4 1966171168
  %v733 = vunpack.c.0.s8 %v732
  %v734 = vlaneseq
  %v735 = vshrl.u32 %v734, 7
  %v736 = vsub.s32 %v733, %v735
  %v737 = vrot.slane %v709, %v736
  %v738 = vcombine.low %v716, %v723
  %v739 = vcombine.low %v730, %v737
  %v741 = vunpack.c.l.s4 1966171168
  %v742 = vunpack.c.0.s8 %v741
  %v743 = vlaneseq
  %v744 = vshrl.u32 %v743, 7
  %v745 = vsub.s32 %v742, %v744
  %v746 = vrot.slane %v738, %v745
  %v748 = vunpack.c.l.s4 1966171168
  %v749 = vunpack.c.0.s8 %v748
  %v750 = vlaneseq
  %v751 = vshrl.u32 %v750, 7
  %v752 = vsub.s32 %v749, %v751
  %v753 = vrot.slane %v739, %v752
  %v754 = vcombine.low %v746, %v753
  %v755 = vcombine.low %v271, %v295
  %v756 = vcombine.low %v309, %v317
  %v757 = vcombine.low %v319, %v302
  %v758 = vcombine.low %v316, %v318
  %v760 = vunpack.c.l.s4 1966171168
  %v761 = vunpack.c.0.s8 %v760
  %v762 = vlaneseq
  %v763 = vshrl.u32 %v762, 7
  %v764 = vsub.s32 %v761, %v763
  %v765 = vrot.slane %v755, %v764
  %v767 = vunpack.c.l.s4 1966171168
  %v768 = vunpack.c.0.s8 %v767
  %v769 = vlaneseq
  %v770 = vshrl.u32 %v769, 7
  %v771 = vsub.s32 %v768, %v770
  %v772 = vrot.slane %v756, %v771
  %v774 = vunpack.c.l.s4 1966171168
  %v775 = vunpack.c.0.s8 %v774
  %v776 = vlaneseq
  %v777 = vshrl.u32 %v776, 7
  %v778 = vsub.s32 %v775, %v777
  %v779 = vrot.slane %v757, %v778
  %v781 = vunpack.c.l.s4 1966171168
  %v782 = vunpack.c.0.s8 %v781
  %v783 = vlaneseq
  %v784 = vshrl.u32 %v783, 7
  %v785 = vsub.s32 %v782, %v784
  %v786 = vrot.slane %v758, %v785
  %v787 = vcombine.low %v765, %v772
  %v788 = vcombine.low %v779, %v786
  %v790 = vunpack.c.l.s4 1966171168
  %v791 = vunpack.c.0.s8 %v790
  %v792 = vlaneseq
  %v793 = vshrl.u32 %v792, 7
  %v794 = vsub.s32 %v791, %v793
  %v795 = vrot.slane %v787, %v794
  %v797 = vunpack.c.l.s4 1966171168
  %v798 = vunpack.c.0.s8 %v797
  %v799 = vlaneseq
  %v800 = vshrl.u32 %v799, 7
  %v801 = vsub.s32 %v798, %v800
  %v802 = vrot.slane %v788, %v801
  %v803 = vcombine.low %v795, %v802
  %v804 = vcombine.low %v320, %v334
  %v806 = vunpack.c.l.s4 1966171168
  %v807 = vunpack.c.0.s8 %v806
  %v808 = vlaneseq
  %v809 = vshrl.u32 %v808, 7
  %v810 = vsub.s32 %v807, %v809
  %v811 = vrot.slane %v804, %v810
  %v813 = vunpack.c.l.s4 1966171168
  %v814 = vunpack.c.0.s8 %v813
  %v815 = vlaneseq
  %v816 = vshrl.u32 %v815, 7
  %v817 = vsub.s32 %v814, %v816
  %v818 = vrot.slane %v811, %v817
  %824 = vmatprep.subr.bf16.mxu0 0
  %825 = vmatpush1.bf16.msra.mxu0 %v583
  %826 = vmatprep.subr.bf16.mxu0 0
  %827 = vmatpush1.bf16.msra.mxu0 %v582
  %828 = vmatprep.subr.bf16.mxu0 0
  %829 = vmatpush1.bf16.msra.mxu0 %v581
  %830 = vmatprep.subr.bf16.mxu0 0
  %831 = vmatpush1.bf16.msra.mxu0 %v580
  %832 = vmatprep.subr.bf16.mxu0 0
  %833 = vmatpush1.bf16.msra.mxu0 %v579
  %834 = vmatprep.subr.bf16.mxu0 0
  %835 = vmatpush1.bf16.msra.mxu0 %v578
  %836 = vmatprep.subr.bf16.mxu0 0
  %837 = vmatpush1.bf16.msra.mxu0 %v577
  %838 = vmatprep.subr.bf16.mxu0 0
  %839 = vmatpush1.bf16.msra.mxu0 %v576
  %840 = vmatprep.subr.bf16.mxu0 0
  %841 = vmatpush2.bf16.msra.mxu0 %v591
  %842 = vmatprep.subr.bf16.mxu0 0
  %843 = vmatpush2.bf16.msra.mxu0 %v590
  %844 = vmatprep.subr.bf16.mxu0 0
  %845 = vmatpush2.bf16.msra.mxu0 %v589
  %846 = vmatprep.subr.bf16.mxu0 0
  %847 = vmatpush2.bf16.msra.mxu0 %v588
  %848 = vmatprep.subr.bf16.mxu0 0
  %849 = vmatpush2.bf16.msra.mxu0 %v587
  %850 = vmatprep.subr.bf16.mxu0 0
  %851 = vmatpush2.bf16.msra.mxu0 %v586
  %852 = vmatprep.subr.bf16.mxu0 0
  %853 = vmatpush2.bf16.msra.mxu0 %v585
  %854 = vmatprep.subr.bf16.mxu0 0
  %855 = vmatpush2.bf16.msra.mxu0 %v584
  %856 = vmatprep.mubr.bf16.mxu0 %v417
  %857 = vmatmul.mubr.bf16.gmra.mxu0 %v416
  %v858 = vpop.f32.mrf.mxu0
  %v859 = vadd.f32 %v656, %v858
  %v860 = vpop.f32.mrf.mxu0
  %v861 = vpop.f32.mrf.mxu0
  %v862 = vadd.f32 %v705, %v861
  %v863 = vpop.f32.mrf.mxu0
  %864 = vmatprep.mubr.bf16.mxu0 %v483
  %865 = vmatmul.mubr.bf16.gmra.mxu0 %v482
  %v866 = vpop.f32.mrf.mxu0
  %v867 = vadd.f32 %v754, %v866
  %v868 = vpop.f32.mrf.mxu0
  %v869 = vpop.f32.mrf.mxu0
  %v870 = vadd.f32 %v803, %v869
  %v871 = vpop.f32.mrf.mxu0
  %872 = vmatprep.mubr.bf16.mxu0 %v505
  %873 = vmatmul.mubr.bf16.gmra.mxu0 %v498
  %v874 = vpop.f32.mrf.mxu0
  %v875 = vadd.f32 %v818, %v874
  %v876 = vpop.f32.mrf.mxu0
  %v877 = vpop.f32.mrf.mxu0
  %v878 = vpop.f32.mrf.mxu0
  %879 = vdwg.mxu0
  %v885 = vcombine.high %v859, %v859
  %v887 = vunpack.c.l.s4 1966171168
  %v888 = vunpack.c.0.s8 %v887
  %v889 = vlaneseq
  %v890 = vshrl.u32 %v889, 7
  %v891 = vsub.s32 %v888, %v890
  %v892 = vrot.slane %v859, %v891
  %v894 = vunpack.c.l.s4 1966171168
  %v895 = vunpack.c.0.s8 %v894
  %v896 = vlaneseq
  %v897 = vshrl.u32 %v896, 7
  %v898 = vsub.s32 %v895, %v897
  %v899 = vrot.slane %v885, %v898
  %v900 = vcombine.high %v892, %v892
  %v901 = vcombine.high %v899, %v899
  %v903 = vunpack.c.l.s4 1966171168
  %v904 = vunpack.c.0.s8 %v903
  %v905 = vlaneseq
  %v906 = vshrl.u32 %v905, 7
  %v907 = vsub.s32 %v904, %v906
  %v908 = vrot.slane %v892, %v907
  %v910 = vunpack.c.l.s4 1966171168
  %v911 = vunpack.c.0.s8 %v910
  %v912 = vlaneseq
  %v913 = vshrl.u32 %v912, 7
  %v914 = vsub.s32 %v911, %v913
  %v915 = vrot.slane %v899, %v914
  %v917 = vunpack.c.l.s4 1966171168
  %v918 = vunpack.c.0.s8 %v917
  %v919 = vlaneseq
  %v920 = vshrl.u32 %v919, 7
  %v921 = vsub.s32 %v918, %v920
  %v922 = vrot.slane %v900, %v921
  %v924 = vunpack.c.l.s4 1966171168
  %v925 = vunpack.c.0.s8 %v924
  %v926 = vlaneseq
  %v927 = vshrl.u32 %v926, 7
  %v928 = vsub.s32 %v925, %v927
  %v929 = vrot.slane %v901, %v928
  %v930 = vcombine.high %v908, %v908
  %v931 = vcombine.high %v915, %v915
  %v932 = vcombine.high %v922, %v922
  %v933 = vcombine.high %v929, %v929
  %v934 = vcombine.high %v862, %v862
  %v936 = vunpack.c.l.s4 1966171168
  %v937 = vunpack.c.0.s8 %v936
  %v938 = vlaneseq
  %v939 = vshrl.u32 %v938, 7
  %v940 = vsub.s32 %v937, %v939
  %v941 = vrot.slane %v862, %v940
  %v943 = vunpack.c.l.s4 1966171168
  %v944 = vunpack.c.0.s8 %v943
  %v945 = vlaneseq
  %v946 = vshrl.u32 %v945, 7
  %v947 = vsub.s32 %v944, %v946
  %v948 = vrot.slane %v934, %v947
  %v949 = vcombine.high %v941, %v941
  %v950 = vcombine.high %v948, %v948
  %v952 = vunpack.c.l.s4 1966171168
  %v953 = vunpack.c.0.s8 %v952
  %v954 = vlaneseq
  %v955 = vshrl.u32 %v954, 7
  %v956 = vsub.s32 %v953, %v955
  %v957 = vrot.slane %v941, %v956
  %v959 = vunpack.c.l.s4 1966171168
  %v960 = vunpack.c.0.s8 %v959
  %v961 = vlaneseq
  %v962 = vshrl.u32 %v961, 7
  %v963 = vsub.s32 %v960, %v962
  %v964 = vrot.slane %v948, %v963
  %v966 = vunpack.c.l.s4 1966171168
  %v967 = vunpack.c.0.s8 %v966
  %v968 = vlaneseq
  %v969 = vshrl.u32 %v968, 7
  %v970 = vsub.s32 %v967, %v969
  %v971 = vrot.slane %v949, %v970
  %v973 = vunpack.c.l.s4 1966171168
  %v974 = vunpack.c.0.s8 %v973
  %v975 = vlaneseq
  %v976 = vshrl.u32 %v975, 7
  %v977 = vsub.s32 %v974, %v976
  %v978 = vrot.slane %v950, %v977
  %v979 = vcombine.high %v957, %v957
  %v980 = vcombine.high %v964, %v964
  %v981 = vcombine.high %v971, %v971
  %v982 = vcombine.high %v978, %v978
  %v983 = vcombine.high %v867, %v867
  %v985 = vunpack.c.l.s4 1966171168
  %v986 = vunpack.c.0.s8 %v985
  %v987 = vlaneseq
  %v988 = vshrl.u32 %v987, 7
  %v989 = vsub.s32 %v986, %v988
  %v990 = vrot.slane %v867, %v989
  %v992 = vunpack.c.l.s4 1966171168
  %v993 = vunpack.c.0.s8 %v992
  %v994 = vlaneseq
  %v995 = vshrl.u32 %v994, 7
  %v996 = vsub.s32 %v993, %v995
  %v997 = vrot.slane %v983, %v996
  %v998 = vcombine.high %v990, %v990
  %v999 = vcombine.high %v997, %v997
  %v1001 = vunpack.c.l.s4 1966171168
  %v1002 = vunpack.c.0.s8 %v1001
  %v1003 = vlaneseq
  %v1004 = vshrl.u32 %v1003, 7
  %v1005 = vsub.s32 %v1002, %v1004
  %v1006 = vrot.slane %v990, %v1005
  %v1008 = vunpack.c.l.s4 1966171168
  %v1009 = vunpack.c.0.s8 %v1008
  %v1010 = vlaneseq
  %v1011 = vshrl.u32 %v1010, 7
  %v1012 = vsub.s32 %v1009, %v1011
  %v1013 = vrot.slane %v997, %v1012
  %v1015 = vunpack.c.l.s4 1966171168
  %v1016 = vunpack.c.0.s8 %v1015
  %v1017 = vlaneseq
  %v1018 = vshrl.u32 %v1017, 7
  %v1019 = vsub.s32 %v1016, %v1018
  %v1020 = vrot.slane %v998, %v1019
  %v1022 = vunpack.c.l.s4 1966171168
  %v1023 = vunpack.c.0.s8 %v1022
  %v1024 = vlaneseq
  %v1025 = vshrl.u32 %v1024, 7
  %v1026 = vsub.s32 %v1023, %v1025
  %v1027 = vrot.slane %v999, %v1026
  %v1028 = vcombine.high %v1006, %v1006
  %v1029 = vcombine.high %v1013, %v1013
  %v1030 = vcombine.high %v1020, %v1020
  %v1031 = vcombine.high %v1027, %v1027
  %v1032 = vcombine.high %v870, %v870
  %v1034 = vunpack.c.l.s4 1966171168
  %v1035 = vunpack.c.0.s8 %v1034
  %v1036 = vlaneseq
  %v1037 = vshrl.u32 %v1036, 7
  %v1038 = vsub.s32 %v1035, %v1037
  %v1039 = vrot.slane %v870, %v1038
  %v1041 = vunpack.c.l.s4 1966171168
  %v1042 = vunpack.c.0.s8 %v1041
  %v1043 = vlaneseq
  %v1044 = vshrl.u32 %v1043, 7
  %v1045 = vsub.s32 %v1042, %v1044
  %v1046 = vrot.slane %v1032, %v1045
  %v1047 = vcombine.high %v1039, %v1039
  %v1048 = vcombine.high %v1046, %v1046
  %v1050 = vunpack.c.l.s4 1966171168
  %v1051 = vunpack.c.0.s8 %v1050
  %v1052 = vlaneseq
  %v1053 = vshrl.u32 %v1052, 7
  %v1054 = vsub.s32 %v1051, %v1053
  %v1055 = vrot.slane %v1039, %v1054
  %v1057 = vunpack.c.l.s4 1966171168
  %v1058 = vunpack.c.0.s8 %v1057
  %v1059 = vlaneseq
  %v1060 = vshrl.u32 %v1059, 7
  %v1061 = vsub.s32 %v1058, %v1060
  %v1062 = vrot.slane %v1046, %v1061
  %v1064 = vunpack.c.l.s4 1966171168
  %v1065 = vunpack.c.0.s8 %v1064
  %v1066 = vlaneseq
  %v1067 = vshrl.u32 %v1066, 7
  %v1068 = vsub.s32 %v1065, %v1067
  %v1069 = vrot.slane %v1047, %v1068
  %v1071 = vunpack.c.l.s4 1966171168
  %v1072 = vunpack.c.0.s8 %v1071
  %v1073 = vlaneseq
  %v1074 = vshrl.u32 %v1073, 7
  %v1075 = vsub.s32 %v1072, %v1074
  %v1076 = vrot.slane %v1048, %v1075
  %v1077 = vcombine.high %v1055, %v1055
  %v1078 = vcombine.high %v1062, %v1062
  %v1079 = vcombine.high %v1069, %v1069
  %v1080 = vcombine.high %v1076, %v1076
  %v1082 = vunpack.c.l.s4 1966171168
  %v1083 = vunpack.c.0.s8 %v1082
  %v1084 = vlaneseq
  %v1085 = vshrl.u32 %v1084, 7
  %v1086 = vsub.s32 %v1083, %v1085
  %v1087 = vrot.slane %v875, %v1086
  %v1088 = vcombine.high %v1087, %v1087
  %v1090 = vunpack.c.l.s4 1966171168
  %v1091 = vunpack.c.0.s8 %v1090
  %v1092 = vlaneseq
  %v1093 = vshrl.u32 %v1092, 7
  %v1094 = vsub.s32 %v1091, %v1093
  %v1095 = vrot.slane %v1087, %v1094
  %v1097 = vunpack.c.l.s4 1966171168
  %v1098 = vunpack.c.0.s8 %v1097
  %v1099 = vlaneseq
  %v1100 = vshrl.u32 %v1099, 7
  %v1101 = vsub.s32 %v1098, %v1100
  %v1102 = vrot.slane %v1088, %v1101
  %v1103 = vcombine.low %v908, %v922
  %v1104 = vcombine.low %v930, %v932
  %v1105 = vcombine.low %v915, %v929
  %v1106 = vcombine.low %v931, %v933
  %v1108 = vunpack.c.l.s4 1966171168
  %v1109 = vunpack.c.0.s8 %v1108
  %v1110 = vlaneseq
  %v1111 = vshrl.u32 %v1110, 7
  %v1112 = vsub.s32 %v1109, %v1111
  %v1113 = vrot.slane %v1103, %v1112
  %v1115 = vunpack.c.l.s4 1966171168
  %v1116 = vunpack.c.0.s8 %v1115
  %v1117 = vlaneseq
  %v1118 = vshrl.u32 %v1117, 7
  %v1119 = vsub.s32 %v1116, %v1118
  %v1120 = vrot.slane %v1104, %v1119
  %v1122 = vunpack.c.l.s4 1966171168
  %v1123 = vunpack.c.0.s8 %v1122
  %v1124 = vlaneseq
  %v1125 = vshrl.u32 %v1124, 7
  %v1126 = vsub.s32 %v1123, %v1125
  %v1127 = vrot.slane %v1105, %v1126
  %v1129 = vunpack.c.l.s4 1966171168
  %v1130 = vunpack.c.0.s8 %v1129
  %v1131 = vlaneseq
  %v1132 = vshrl.u32 %v1131, 7
  %v1133 = vsub.s32 %v1130, %v1132
  %v1134 = vrot.slane %v1106, %v1133
  %v1135 = vcombine.low %v1113, %v1120
  %v1136 = vcombine.low %v1127, %v1134
  %v1138 = vunpack.c.l.s4 1966171168
  %v1139 = vunpack.c.0.s8 %v1138
  %v1140 = vlaneseq
  %v1141 = vshrl.u32 %v1140, 7
  %v1142 = vsub.s32 %v1139, %v1141
  %v1143 = vrot.slane %v1135, %v1142
  %v1145 = vunpack.c.l.s4 1966171168
  %v1146 = vunpack.c.0.s8 %v1145
  %v1147 = vlaneseq
  %v1148 = vshrl.u32 %v1147, 7
  %v1149 = vsub.s32 %v1146, %v1148
  %v1150 = vrot.slane %v1136, %v1149
  %v1151 = vcombine.low %v1143, %v1150
  %v1152 = vcombine.low %v957, %v971
  %v1153 = vcombine.low %v979, %v981
  %v1154 = vcombine.low %v964, %v978
  %v1155 = vcombine.low %v980, %v982
  %v1157 = vunpack.c.l.s4 1966171168
  %v1158 = vunpack.c.0.s8 %v1157
  %v1159 = vlaneseq
  %v1160 = vshrl.u32 %v1159, 7
  %v1161 = vsub.s32 %v1158, %v1160
  %v1162 = vrot.slane %v1152, %v1161
  %v1164 = vunpack.c.l.s4 1966171168
  %v1165 = vunpack.c.0.s8 %v1164
  %v1166 = vlaneseq
  %v1167 = vshrl.u32 %v1166, 7
  %v1168 = vsub.s32 %v1165, %v1167
  %v1169 = vrot.slane %v1153, %v1168
  %v1171 = vunpack.c.l.s4 1966171168
  %v1172 = vunpack.c.0.s8 %v1171
  %v1173 = vlaneseq
  %v1174 = vshrl.u32 %v1173, 7
  %v1175 = vsub.s32 %v1172, %v1174
  %v1176 = vrot.slane %v1154, %v1175
  %v1178 = vunpack.c.l.s4 1966171168
  %v1179 = vunpack.c.0.s8 %v1178
  %v1180 = vlaneseq
  %v1181 = vshrl.u32 %v1180, 7
  %v1182 = vsub.s32 %v1179, %v1181
  %v1183 = vrot.slane %v1155, %v1182
  %v1184 = vcombine.low %v1162, %v1169
  %v1185 = vcombine.low %v1176, %v1183
  %v1187 = vunpack.c.l.s4 1966171168
  %v1188 = vunpack.c.0.s8 %v1187
  %v1189 = vlaneseq
  %v1190 = vshrl.u32 %v1189, 7
  %v1191 = vsub.s32 %v1188, %v1190
  %v1192 = vrot.slane %v1184, %v1191
  %v1194 = vunpack.c.l.s4 1966171168
  %v1195 = vunpack.c.0.s8 %v1194
  %v1196 = vlaneseq
  %v1197 = vshrl.u32 %v1196, 7
  %v1198 = vsub.s32 %v1195, %v1197
  %v1199 = vrot.slane %v1185, %v1198
  %v1200 = vcombine.low %v1192, %v1199
  %v1202 = vunpack.c.l.s4 1966171168
  %v1203 = vunpack.c.0.s8 %v1202
  %v1204 = vlaneseq
  %v1205 = vshrl.u32 %v1204, 7
  %v1206 = vsub.s32 %v1203, %v1205
  %v1207 = vrot.slane %v1006, %v1206
  %v1209 = vunpack.c.l.s4 1966171168
  %v1210 = vunpack.c.0.s8 %v1209
  %v1211 = vlaneseq
  %v1212 = vshrl.u32 %v1211, 7
  %v1213 = vsub.s32 %v1210, %v1212
  %v1214 = vrot.slane %v1207, %v1213
  %v1215 = vcombine.low %v1020, %v1028
  %v1216 = vcombine.low %v1030, %v1013
  %v1217 = vcombine.low %v1027, %v1029
  %v1218 = vcombine.low %v1031, %v1055
  %v1220 = vunpack.c.l.s4 1966171168
  %v1221 = vunpack.c.0.s8 %v1220
  %v1222 = vlaneseq
  %v1223 = vshrl.u32 %v1222, 7
  %v1224 = vsub.s32 %v1221, %v1223
  %v1225 = vrot.slane %v1215, %v1224
  %v1227 = vunpack.c.l.s4 1966171168
  %v1228 = vunpack.c.0.s8 %v1227
  %v1229 = vlaneseq
  %v1230 = vshrl.u32 %v1229, 7
  %v1231 = vsub.s32 %v1228, %v1230
  %v1232 = vrot.slane %v1216, %v1231
  %v1234 = vunpack.c.l.s4 1966171168
  %v1235 = vunpack.c.0.s8 %v1234
  %v1236 = vlaneseq
  %v1237 = vshrl.u32 %v1236, 7
  %v1238 = vsub.s32 %v1235, %v1237
  %v1239 = vrot.slane %v1217, %v1238
  %v1241 = vunpack.c.l.s4 1966171168
  %v1242 = vunpack.c.0.s8 %v1241
  %v1243 = vlaneseq
  %v1244 = vshrl.u32 %v1243, 7
  %v1245 = vsub.s32 %v1242, %v1244
  %v1246 = vrot.slane %v1218, %v1245
  %v1247 = vcombine.low %v1225, %v1232
  %v1248 = vcombine.low %v1239, %v1246
  %v1250 = vunpack.c.l.s4 1966171168
  %v1251 = vunpack.c.0.s8 %v1250
  %v1252 = vlaneseq
  %v1253 = vshrl.u32 %v1252, 7
  %v1254 = vsub.s32 %v1251, %v1253
  %v1255 = vrot.slane %v1247, %v1254
  %v1257 = vunpack.c.l.s4 1966171168
  %v1258 = vunpack.c.0.s8 %v1257
  %v1259 = vlaneseq
  %v1260 = vshrl.u32 %v1259, 7
  %v1261 = vsub.s32 %v1258, %v1260
  %v1262 = vrot.slane %v1248, %v1261
  %v1263 = vcombine.low %v1255, %v1262
  %v1264 = vcombine.low %v1069, %v1077
  %v1265 = vcombine.low %v1079, %v1062
  %v1266 = vcombine.low %v1076, %v1078
  %v1267 = vcombine.low %v1080, %v1095
  %v1269 = vunpack.c.l.s4 1966171168
  %v1270 = vunpack.c.0.s8 %v1269
  %v1271 = vlaneseq
  %v1272 = vshrl.u32 %v1271, 7
  %v1273 = vsub.s32 %v1270, %v1272
  %v1274 = vrot.slane %v1264, %v1273
  %v1276 = vunpack.c.l.s4 1966171168
  %v1277 = vunpack.c.0.s8 %v1276
  %v1278 = vlaneseq
  %v1279 = vshrl.u32 %v1278, 7
  %v1280 = vsub.s32 %v1277, %v1279
  %v1281 = vrot.slane %v1265, %v1280
  %v1283 = vunpack.c.l.s4 1966171168
  %v1284 = vunpack.c.0.s8 %v1283
  %v1285 = vlaneseq
  %v1286 = vshrl.u32 %v1285, 7
  %v1287 = vsub.s32 %v1284, %v1286
  %v1288 = vrot.slane %v1266, %v1287
  %v1290 = vunpack.c.l.s4 1966171168
  %v1291 = vunpack.c.0.s8 %v1290
  %v1292 = vlaneseq
  %v1293 = vshrl.u32 %v1292, 7
  %v1294 = vsub.s32 %v1291, %v1293
  %v1295 = vrot.slane %v1267, %v1294
  %v1296 = vcombine.low %v1274, %v1281
  %v1297 = vcombine.low %v1288, %v1295
  %v1299 = vunpack.c.l.s4 1966171168
  %v1300 = vunpack.c.0.s8 %v1299
  %v1301 = vlaneseq
  %v1302 = vshrl.u32 %v1301, 7
  %v1303 = vsub.s32 %v1300, %v1302
  %v1304 = vrot.slane %v1296, %v1303
  %v1306 = vunpack.c.l.s4 1966171168
  %v1307 = vunpack.c.0.s8 %v1306
  %v1308 = vlaneseq
  %v1309 = vshrl.u32 %v1308, 7
  %v1310 = vsub.s32 %v1307, %v1309
  %v1311 = vrot.slane %v1297, %v1310
  %v1312 = vcombine.low %v1304, %v1311
  %v1314 = vunpack.c.l.s4 1966171168
  %v1315 = vunpack.c.0.s8 %v1314
  %v1316 = vlaneseq
  %v1317 = vshrl.u32 %v1316, 7
  %v1318 = vsub.s32 %v1315, %v1317
  %v1319 = vrot.slane %v1102, %v1318
  %v1321 = vunpack.c.l.s4 1966171168
  %v1322 = vunpack.c.0.s8 %v1321
  %v1323 = vlaneseq
  %v1324 = vshrl.u32 %v1323, 7
  %v1325 = vsub.s32 %v1322, %v1324
  %v1326 = vrot.slane %v1319, %v1325
  %v1333 = vpack.c.bf16 %v1200, %v1151
  %v1334 = vpack.c.bf16 %v1214, %v1214
  %v1335 = vpack.c.bf16 %v1312, %v1263
  %v1336 = vpack.c.bf16 %v1326, %v1326
  %v1341 = vunpack.c.l.b16 %v1333
  %v1342 = vunpack.c.h.b16 %v1333
  %v1343 = vunpack.c.l.b16 %v1334
  %v1344 = vunpack.c.l.b16 %v1335
  %v1345 = vunpack.c.h.b16 %v1335
  %v1346 = vunpack.c.l.b16 %v1336
  %v1347 = vpack.c.b16 %v1341, %v1341
  %v1348 = vpack.c.b16 %v1342, %v1342
  %v1349 = vpack.c.b16 %v1343, %v1343
  %v1350 = vpack.c.b16 %v1344, %v1344
  %v1351 = vpack.c.b16 %v1345, %v1345
  %v1352 = vpack.c.b16 %v1346, %v1346
  %1359 = vst [vmem:[%s3] sm:$0xf] %v1347
  %1360 = vst [vmem:[%s3 + $0x4] sm:$0xf] %v1348
  %vm1361 = vcmask 1040384
  %vm1362 = vsmask.f32 256
  %vm1363 = vmand %vm1361, %vm1362
  %v1364 = vld [vmem:[%s3 + $0x8] sm:$0x1]
  %v1365 = vsel %vm1363, %v1349, %v1364
  %1366 = vst [vmem:[%s3 + $0x8] sm:$0x1] %v1365
  %1367 = vst [vmem:[%s3 + $0xc] sm:$0xf] %v1350
  %1368 = vst [vmem:[%s3 + $0x10] sm:$0xf] %v1351
  %v1369 = vld [vmem:[%s3 + $0x14] sm:$0x1]
  %v1370 = vsel %vm1363, %v1352, %v1369
  %1371 = vst [vmem:[%s3 + $0x14] sm:$0x1] %v1370
  // Predicated region
  $region14: #{patch_embedding_forward.1} parent=0 // pred_check
    _
  $region15: #{patch_embedding_forward.1} parent=0 // pred_check_branch
    %1373 = sbr.rel (0) target = $region17
  $region16: #{patch_embedding_forward.1} parent=0 // pred_region
    _
  $region17: #{patch_embedding_forward.1} parent=0 // pred_fallthru
    _
  // Predicated region
  $region18: #{patch_embedding_forward.1} parent=0 // pred_check
    _
  $region19: #{patch_embedding_forward.1} parent=0 // pred_check_branch
    %1375 = sbr.rel (0) target = $region21
  $region20: #{patch_embedding_forward.1} parent=0 // pred_region
    _
  $region21: #{patch_embedding_forward.1} parent=0 // pred_fallthru
    _

</llo_original>
